<compile_context>
chip_gen: v7x
topology: tpu7x:2x2x1
jax: 0.10.0
libtpu: 0.0.40
codegen_flags: <defaults>
</compile_context>

<pallas_src>
import math

import jax
import jax.numpy as jnp
from jax.experimental import pallas as pl
from jax.experimental.pallas import tpu as pltpu

IN_FEATURES = 6
HIDDEN = 256
NUM_CLASSES = 2
OUT_PAD = 8          # round 2 -> 8 output lanes (zero cols, sliced off outside)
TM_MAX = 2048        # max batch-tile rows (well inside scoped VMEM on v5e/v6e/v7x)


def _rup(x, m):
    return ((x + m - 1) // m) * m


# ----------------------------- Pallas kernel -----------------------------

def _mlp_kernel(x_ref, w1_ref, b1_ref, w2_ref, b2_ref, w3_ref, b3_ref,
                wc_ref, bc_ref, o_ref):
    zero = jnp.bfloat16(0)
    # Linear(6->256) + ReLU  (bf16 MXU operands, f32 accumulation)
    h = jnp.dot(x_ref[...].astype(jnp.bfloat16), w1_ref[...],
                preferred_element_type=jnp.float32) + b1_ref[...]
    h = jnp.maximum(h.astype(jnp.bfloat16), zero)
    # Linear(256->256) + ReLU
    h = jnp.dot(h, w2_ref[...], preferred_element_type=jnp.float32) + b2_ref[...]
    h = jnp.maximum(h.astype(jnp.bfloat16), zero)
    # Linear(256->256) + ReLU
    h = jnp.dot(h, w3_ref[...], preferred_element_type=jnp.float32) + b3_ref[...]
    h = jnp.maximum(h.astype(jnp.bfloat16), zero)
    # classifier Linear(256->2), padded to 8 output lanes
    o_ref[...] = jnp.dot(h, wc_ref[...],
                         preferred_element_type=jnp.float32) + bc_ref[...]


def _pick_tiling(B, tm_max=TM_MAX):
    """Choose (tm, Bp) so padding stays < 8 rows and, when possible, >= 2
    grid steps exist (lets the 'parallel' axis shard across v7x's 2 TCs)."""
    Bp8 = _rup(B, 8)
    steps = max(1, -(-Bp8 // tm_max))          # cdiv
    if steps == 1 and Bp8 >= 16:
        steps = 2                              # ensure dual-TC sharding on v7x
    tm = _rup(-(-Bp8 // steps), 8)             # cdiv, rounded to sublane mult.
    return tm, tm * steps


def new_net_forward(params, x):
    """x: (B, 6) float32 -> logits (B, 2) float32."""
    B, F = x.shape
    assert F == IN_FEATURES
    tm, Bp = _pick_tiling(B)
    xp = x if Bp == B else jnp.pad(x, ((0, Bp - B), (0, 0)))

    weight_bytes = sum(int(v.size) * v.dtype.itemsize for v in params.values())
    cost = pl.CostEstimate(
        flops=2 * Bp * (IN_FEATURES * HIDDEN + 2 * HIDDEN * HIDDEN
                        + HIDDEN * OUT_PAD),
        transcendentals=0,
        bytes_accessed=Bp * IN_FEATURES * 4 + Bp * OUT_PAD * 4 + weight_bytes,
    )

    out = pl.pallas_call(
        _mlp_kernel,
        out_shape=jax.ShapeDtypeStruct((Bp, OUT_PAD), jnp.float32),
        grid_spec=pltpu.PrefetchScalarGridSpec(
            num_scalar_prefetch=0,
            grid=(Bp // tm,),
            in_specs=[
                pl.BlockSpec((tm, IN_FEATURES), lambda i: (i, 0)),
                pl.BlockSpec((IN_FEATURES, HIDDEN), lambda i: (0, 0)),
                pl.BlockSpec((1, HIDDEN), lambda i: (0, 0)),
                pl.BlockSpec((HIDDEN, HIDDEN), lambda i: (0, 0)),
                pl.BlockSpec((1, HIDDEN), lambda i: (0, 0)),
                pl.BlockSpec((HIDDEN, HIDDEN), lambda i: (0, 0)),
                pl.BlockSpec((1, HIDDEN), lambda i: (0, 0)),
                pl.BlockSpec((HIDDEN, OUT_PAD), lambda i: (0, 0)),
                pl.BlockSpec((1, OUT_PAD), lambda i: (0, 0)),
            ],
            out_specs=pl.BlockSpec((tm, OUT_PAD), lambda i: (i, 0)),
        ),
        compiler_params=pltpu.CompilerParams(
            dimension_semantics=("parallel",)),
        cost_estimate=cost,
    )(xp, params["w1"], params["b1"], params["w2"], params["b2"],
      params["w3"], params["b3"], params["wc"], params["bc"])
    return out[:B, :NUM_CLASSES]


# ----------------------------- parameters -----------------------------

def _linear_init(key, fan_in, fan_out):
    # PyTorch nn.Linear default: U(-1/sqrt(fan_in), 1/sqrt(fan_in)) for W and b.
    kw, kb = jax.random.split(key)
    bound = 1.0 / math.sqrt(fan_in)
    w = jax.random.uniform(kw, (fan_in, fan_out), jnp.float32, -bound, bound)
    b = jax.random.uniform(kb, (fan_out,), jnp.float32, -bound, bound)
    return w, b


def build_params(key, num_classes=NUM_CLASSES):
    k1, k2, k3, k4 = jax.random.split(key, 4)
    w1, b1 = _linear_init(k1, IN_FEATURES, HIDDEN)
    w2, b2 = _linear_init(k2, HIDDEN, HIDDEN)
    w3, b3 = _linear_init(k3, HIDDEN, HIDDEN)
    wc, bc = _linear_init(k4, HIDDEN, num_classes)
    # zero-pad only the 2-column classifier to 8 lanes (inert, sliced off outside)
    wc = jnp.pad(wc, ((0, 0), (0, OUT_PAD - num_classes)))
    bc = jnp.pad(bc, (0, OUT_PAD - num_classes))
    return {
        "w1": w1.astype(jnp.bfloat16), "b1": b1.reshape(1, HIDDEN),
        "w2": w2.astype(jnp.bfloat16), "b2": b2.reshape(1, HIDDEN),
        "w3": w3.astype(jnp.bfloat16), "b3": b3.reshape(1, HIDDEN),
        "wc": wc.astype(jnp.bfloat16), "bc": bc.reshape(1, OUT_PAD),
    }


# ----------------------------- reference (sanity check) -----------------------------

def _ref_forward(params, x):
    h = jnp.maximum(x @ params["w1"].astype(jnp.float32) + params["b1"], 0.0)
    h = jnp.maximum(h @ params["w2"].astype(jnp.float32) + params["b2"], 0.0)
    h = jnp.maximum(h @ params["w3"].astype(jnp.float32) + params["b3"], 0.0)
    out = h @ params["wc"].astype(jnp.float32) + params["bc"]
    return out[:, :NUM_CLASSES]


if __name__ == "__main__":
    key = jax.random.PRNGKey(0)
    pkey, xkey = jax.random.split(key)
    params = build_params(pkey)
    x = jax.random.normal(xkey, (128, IN_FEATURES), jnp.float32)

    fwd = jax.jit(new_net_forward)
    logits = fwd(params, x)
    jax.block_until_ready(logits)
    assert logits.shape == (128, NUM_CLASSES)

    ref = _ref_forward(params, x)
    max_err = float(jnp.max(jnp.abs(logits - ref)))
    assert max_err < 5e-2, f"mismatch vs reference: {max_err}"

    # also exercise a non-multiple-of-8 batch (adaptive tiling / row padding)
    x2 = jax.random.normal(xkey, (37, IN_FEATURES), jnp.float32)
    logits2 = jax.block_until_ready(fwd(params, x2))
    assert logits2.shape == (37, NUM_CLASSES)
    max_err2 = float(jnp.max(jnp.abs(logits2 - _ref_forward(params, x2))))
    assert max_err2 < 5e-2, f"mismatch vs reference (B=37): {max_err2}"

    print("KERNEL_OK")
</pallas_src>

<mosaic_0001>
module attributes {stable_mosaic.version = 11 : i64} {
  func.func @_mlp_kernel(%arg0: i32, %arg1: memref<64x6xf32, #tpu.memory_space<vmem>>, %arg2: memref<6x256xbf16, #tpu.memory_space<vmem>>, %arg3: memref<1x256xf32, #tpu.memory_space<vmem>>, %arg4: memref<256x256xbf16, #tpu.memory_space<vmem>>, %arg5: memref<1x256xf32, #tpu.memory_space<vmem>>, %arg6: memref<256x256xbf16, #tpu.memory_space<vmem>>, %arg7: memref<1x256xf32, #tpu.memory_space<vmem>>, %arg8: memref<256x8xbf16, #tpu.memory_space<vmem>>, %arg9: memref<1x8xf32, #tpu.memory_space<vmem>>, %arg10: memref<64x8xf32, #tpu.memory_space<vmem>>) attributes {dimension_semantics = [#tpu.dimension_semantics<parallel>], iteration_bounds = array<i64: 2>, scalar_prefetch = 0 : i64, scratch_operands = 0 : i64, tpu.core_type = #tpu.core_type<tc>, window_params = [{transform_indices = @transform_0, window_bounds = array<i64: 64, 6>}, {pipeline_mode = #tpu.pipeline_mode<synchronous>, transform_indices = @transform_1, window_bounds = array<i64: 6, 256>}, {pipeline_mode = #tpu.pipeline_mode<synchronous>, transform_indices = @transform_2, window_bounds = array<i64: 1, 256>}, {pipeline_mode = #tpu.pipeline_mode<synchronous>, transform_indices = @transform_3, window_bounds = array<i64: 256, 256>}, {pipeline_mode = #tpu.pipeline_mode<synchronous>, transform_indices = @transform_4, window_bounds = array<i64: 1, 256>}, {pipeline_mode = #tpu.pipeline_mode<synchronous>, transform_indices = @transform_5, window_bounds = array<i64: 256, 256>}, {pipeline_mode = #tpu.pipeline_mode<synchronous>, transform_indices = @transform_6, window_bounds = array<i64: 1, 256>}, {pipeline_mode = #tpu.pipeline_mode<synchronous>, transform_indices = @transform_7, window_bounds = array<i64: 256, 8>}, {pipeline_mode = #tpu.pipeline_mode<synchronous>, transform_indices = @transform_8, window_bounds = array<i64: 1, 8>}, {transform_indices = @transform_9, window_bounds = array<i64: 64, 8>}]} {
    %c0 = arith.constant 0 : index
    %c0_0 = arith.constant 0 : index
    %0 = vector.load %arg1[%c0, %c0_0] : memref<64x6xf32, #tpu.memory_space<vmem>>, vector<64x6xf32>
    %1 = arith.truncf %0 : vector<64x6xf32> to vector<64x6xbf16>
    %c0_1 = arith.constant 0 : index
    %c0_2 = arith.constant 0 : index
    %2 = vector.load %arg2[%c0_1, %c0_2] : memref<6x256xbf16, #tpu.memory_space<vmem>>, vector<6x256xbf16>
    %cst = arith.constant dense<0.000000e+00> : vector<64x256xf32>
    %3 = tpu.matmul %1, %2, %cst {dimension_numbers = #tpu.dot_dimension_numbers<[1], [0], [0], [1], [0, 0, 1, 1], [], []>} : vector<64x6xbf16>, vector<6x256xbf16>, vector<64x256xf32> -> vector<64x256xf32>
    %c0_3 = arith.constant 0 : index
    %c0_4 = arith.constant 0 : index
    %4 = vector.load %arg3[%c0_3, %c0_4] : memref<1x256xf32, #tpu.memory_space<vmem>>, vector<1x256xf32>
    %5 = vector.broadcast %4 : vector<1x256xf32> to vector<64x256xf32>
    %6 = arith.addf %3, %5 : vector<64x256xf32>
    %7 = arith.truncf %6 : vector<64x256xf32> to vector<64x256xbf16>
    %cst_5 = arith.constant 0.000000e+00 : bf16
    %8 = vector.broadcast %cst_5 : bf16 to vector<64x256xbf16>
    %9 = arith.maximumf %7, %8 : vector<64x256xbf16>
    %c0_6 = arith.constant 0 : index
    %c0_7 = arith.constant 0 : index
    %10 = vector.load %arg4[%c0_6, %c0_7] : memref<256x256xbf16, #tpu.memory_space<vmem>>, vector<256x256xbf16>
    %cst_8 = arith.constant dense<0.000000e+00> : vector<64x256xf32>
    %11 = tpu.matmul %9, %10, %cst_8 {dimension_numbers = #tpu.dot_dimension_numbers<[1], [0], [0], [1], [0, 0, 1, 1], [], []>} : vector<64x256xbf16>, vector<256x256xbf16>, vector<64x256xf32> -> vector<64x256xf32>
    %c0_9 = arith.constant 0 : index
    %c0_10 = arith.constant 0 : index
    %12 = vector.load %arg5[%c0_9, %c0_10] : memref<1x256xf32, #tpu.memory_space<vmem>>, vector<1x256xf32>
    %13 = vector.broadcast %12 : vector<1x256xf32> to vector<64x256xf32>
    %14 = arith.addf %11, %13 : vector<64x256xf32>
    %15 = arith.truncf %14 : vector<64x256xf32> to vector<64x256xbf16>
    %cst_11 = arith.constant 0.000000e+00 : bf16
    %16 = vector.broadcast %cst_11 : bf16 to vector<64x256xbf16>
    %17 = arith.maximumf %15, %16 : vector<64x256xbf16>
    %c0_12 = arith.constant 0 : index
    %c0_13 = arith.constant 0 : index
    %18 = vector.load %arg6[%c0_12, %c0_13] : memref<256x256xbf16, #tpu.memory_space<vmem>>, vector<256x256xbf16>
    %cst_14 = arith.constant dense<0.000000e+00> : vector<64x256xf32>
    %19 = tpu.matmul %17, %18, %cst_14 {dimension_numbers = #tpu.dot_dimension_numbers<[1], [0], [0], [1], [0, 0, 1, 1], [], []>} : vector<64x256xbf16>, vector<256x256xbf16>, vector<64x256xf32> -> vector<64x256xf32>
    %c0_15 = arith.constant 0 : index
    %c0_16 = arith.constant 0 : index
    %20 = vector.load %arg7[%c0_15, %c0_16] : memref<1x256xf32, #tpu.memory_space<vmem>>, vector<1x256xf32>
    %21 = vector.broadcast %20 : vector<1x256xf32> to vector<64x256xf32>
    %22 = arith.addf %19, %21 : vector<64x256xf32>
    %23 = arith.truncf %22 : vector<64x256xf32> to vector<64x256xbf16>
    %cst_17 = arith.constant 0.000000e+00 : bf16
    %24 = vector.broadcast %cst_17 : bf16 to vector<64x256xbf16>
    %25 = arith.maximumf %23, %24 : vector<64x256xbf16>
    %c0_18 = arith.constant 0 : index
    %c0_19 = arith.constant 0 : index
    %26 = vector.load %arg8[%c0_18, %c0_19] : memref<256x8xbf16, #tpu.memory_space<vmem>>, vector<256x8xbf16>
    %cst_20 = arith.constant dense<0.000000e+00> : vector<64x8xf32>
    %27 = tpu.matmul %25, %26, %cst_20 {dimension_numbers = #tpu.dot_dimension_numbers<[1], [0], [0], [1], [0, 0, 1, 1], [], []>} : vector<64x256xbf16>, vector<256x8xbf16>, vector<64x8xf32> -> vector<64x8xf32>
    %c0_21 = arith.constant 0 : index
    %c0_22 = arith.constant 0 : index
    %28 = vector.load %arg9[%c0_21, %c0_22] : memref<1x8xf32, #tpu.memory_space<vmem>>, vector<1x8xf32>
    %29 = vector.broadcast %28 : vector<1x8xf32> to vector<64x8xf32>
    %30 = arith.addf %27, %29 : vector<64x8xf32>
    %c0_23 = arith.constant 0 : index
    %c0_24 = arith.constant 0 : index
    %31 = vector.load %arg10[%c0_23, %c0_24] : memref<64x8xf32, #tpu.memory_space<vmem>>, vector<64x8xf32>
    tpu.vector_store %arg10[%c0_23, %c0_24], %30 {strides = array<i32>} : memref<64x8xf32, #tpu.memory_space<vmem>>, vector<64x8xf32>,
    return
  }
  func.func @transform_0(%arg0: i32) -> (i32, i32) {
    %c0_i32 = arith.constant 0 : i32
    %c0_i32_0 = arith.constant 0 : i32
    return %arg0, %c0_i32 : i32, i32
  }
  func.func @transform_1(%arg0: i32) -> (i32, i32) {
    %c0_i32 = arith.constant 0 : i32
    %c0_i32_0 = arith.constant 0 : i32
    %c0_i32_1 = arith.constant 0 : i32
    return %c0_i32, %c0_i32_0 : i32, i32
  }
  func.func @transform_2(%arg0: i32) -> (i32, i32) {
    %c0_i32 = arith.constant 0 : i32
    %c0_i32_0 = arith.constant 0 : i32
    %c0_i32_1 = arith.constant 0 : i32
    return %c0_i32, %c0_i32_0 : i32, i32
  }
  func.func @transform_3(%arg0: i32) -> (i32, i32) {
    %c0_i32 = arith.constant 0 : i32
    %c0_i32_0 = arith.constant 0 : i32
    %c0_i32_1 = arith.constant 0 : i32
    return %c0_i32, %c0_i32_0 : i32, i32
  }
  func.func @transform_4(%arg0: i32) -> (i32, i32) {
    %c0_i32 = arith.constant 0 : i32
    %c0_i32_0 = arith.constant 0 : i32
    %c0_i32_1 = arith.constant 0 : i32
    return %c0_i32, %c0_i32_0 : i32, i32
  }
  func.func @transform_5(%arg0: i32) -> (i32, i32) {
    %c0_i32 = arith.constant 0 : i32
    %c0_i32_0 = arith.constant 0 : i32
    %c0_i32_1 = arith.constant 0 : i32
    return %c0_i32, %c0_i32_0 : i32, i32
  }
  func.func @transform_6(%arg0: i32) -> (i32, i32) {
    %c0_i32 = arith.constant 0 : i32
    %c0_i32_0 = arith.constant 0 : i32
    %c0_i32_1 = arith.constant 0 : i32
    return %c0_i32, %c0_i32_0 : i32, i32
  }
  func.func @transform_7(%arg0: i32) -> (i32, i32) {
    %c0_i32 = arith.constant 0 : i32
    %c0_i32_0 = arith.constant 0 : i32
    %c0_i32_1 = arith.constant 0 : i32
    return %c0_i32, %c0_i32_0 : i32, i32
  }
  func.func @transform_8(%arg0: i32) -> (i32, i32) {
    %c0_i32 = arith.constant 0 : i32
    %c0_i32_0 = arith.constant 0 : i32
    %c0_i32_1 = arith.constant 0 : i32
    return %c0_i32, %c0_i32_0 : i32, i32
  }
  func.func @transform_9(%arg0: i32) -> (i32, i32) {
    %c0_i32 = arith.constant 0 : i32
    %c0_i32_0 = arith.constant 0 : i32
    return %arg0, %c0_i32 : i32, i32
  }
}

</mosaic_0001>

<llo_original>
// kernel: new_net_forward.1
$region0: #{new_net_forward.1}
  #allocation0 [shape = 'u32[]', space=smem, size = 0x4, offset = 0x4, fixed_abs, tag = 'smem constant byte address 0x4 - core index']
  #allocation1 [shape = 'u32[144,128]{1,0:T(1,128)}', space=vmem, size = 0x12000, scoped, tag = 'internal scratch']
  %s0 = inlined_call_operand.vmem [shape: f32[128,6], index: 0, kind: input, shape index: {}]
  %s1 = inlined_call_operand.vmem [shape: bf16[6,256], index: 1, kind: input, shape index: {}]
  %s2 = inlined_call_operand.vmem [shape: f32[1,256], index: 2, kind: input, shape index: {}]
  %s3 = inlined_call_operand.vmem [shape: bf16[256,256], index: 3, kind: input, shape index: {}]
  %s4 = inlined_call_operand.vmem [shape: f32[1,256], index: 4, kind: input, shape index: {}]
  %s5 = inlined_call_operand.hbm [shape: bf16[256,256], index: 5, kind: input, shape index: {}]
  %s6 = inlined_call_operand.vmem [shape: f32[1,256], index: 6, kind: input, shape index: {}]
  %s7 = inlined_call_operand.vmem [shape: bf16[256,8], index: 7, kind: input, shape index: {}]
  %s8 = inlined_call_operand.vmem [shape: f32[1,8], index: 8, kind: input, shape index: {}]
  %s9 = inlined_call_operand.vmem [shape: f32[128,8], index: 9, kind: output, shape index: {}]
  %s10 = sld [smem:[#allocation0]]
  $region73: #{new_net_forward.1} parent=0
    _
  %s12 = ssub.s32 1, %s10
  %s13 = scalar_select 0, %s12, %s10
  $region1: #{new_net_forward.1} parent=0
    #allocation2 [shape = 'u8[131072]{0}', space=vmem, size = 0x20000, scoped, tag = 'input window, operand 5, single buffered']
    #allocation3 [shape = 's32[2]{0}', space=sflag, size = 0x8, scoped, tag = 'scoped memory for new_net_forward.1']
    %14 = vsyncpa [#allocation3], 0
    loop: start=0, step=1, limit=4
    $region2: #{new_net_forward.1} parent=1 // loop_pre_header
      _
    $region3: #{new_net_forward.1} parent=1 // loop_header
      %s16 = sphi 0, %s20
      %p17 = scmp.ge.s32.totalorder %s16, 4
      %s26 = sphi 0, %s28
      %s29 = sphi 0, %s26
      %s30 = sphi 0, %s29
      %s46 = sphi 0, %s30
      %s50 = sphi 0, %s50
      %s52 = sphi 0, %s50
      %s53 = sphi 0, %s52
      %s67 = sphi 0, %s53
      %s71 = sphi 0, %s71
      %s73 = sphi 0, %s71
      %s74 = sphi 0, %s73
      %s88 = sphi 0, %s74
      %s92 = sphi 0, %s92
      %s94 = sphi 0, %s92
      %s95 = sphi 0, %s94
      %s109 = sphi 0, %s95
      %s113 = sphi 0, %s113
      %s115 = sphi 0, %s113
      %s116 = sphi 0, %s115
      %s130 = sphi 0, %s116
      %s134 = sphi 0, %s134
      %s136 = sphi 0, %s134
      %s137 = sphi 0, %s136
      %s151 = sphi 0, %s137
      %s155 = sphi 0, %s155
      %s157 = sphi 0, %s155
      %s158 = sphi 0, %s157
      %s172 = sphi 0, %s158
      %s176 = sphi 0, %s176
      %s178 = sphi 0, %s176
      %s179 = sphi 0, %s178
      %s193 = sphi 0, %s179
      %s197 = sphi 0, %s197
      %s199 = sphi 0, %s197
      %s200 = sphi 0, %s199
      %s214 = sphi 0, %s200
      %s220 = sphi 0, %s222
      %s223 = sphi 0, %s220
      %s224 = sphi 0, %s223
      %s240 = sphi 0, %s224
    $region4: #{new_net_forward.1} parent=1 // loop_header_branch
      %19 = sbr.rel (%p17) target = $region8
    $region5: #{new_net_forward.1} parent=1 // loop_body
      %s21 = ssub.s32 %s16, 1
      %s22 = ssub.s32 %s16, 2
      %s23 = sadd.s32 %s16, 1
      %s24 = ssub.s32 %s16, %s23
      %p25 = scmp.eq.s32.totalorder %s24, 0
      %s27 = sadd.s32 %s26, 1
      %s28 = scalar_select %p25, %s26, %s27
      %p31 = pneg %p25
      %p32 = scmp.eq.s32.totalorder %s16, 1
      %p33 = por %p31, %p32
      %p34 = scmp.ne.s32.totalorder %s26, %s29
      %p35 = scmp.eq.s32.totalorder %s16, 0
      %p36 = por %p34, %p35
      %p37 = scmp.ne.s32.totalorder %s26, %s29
      %p38 = scmp.eq.s32.totalorder %s21, 1
      %p39 = por %p37, %p38
      %p40 = scmp.ne.s32.totalorder %s29, %s30
      %p41 = scmp.eq.s32.totalorder %s21, 0
      %p42 = por %p40, %p41
      %p43 = scmp.ne.s32.totalorder %s29, %s30
      %p44 = scmp.eq.s32.totalorder %s22, 1
      %p45 = por %p43, %p44
      %p47 = scmp.ne.s32.totalorder %s30, %s46
      %p48 = scmp.eq.s32.totalorder %s22, 0
      %p49 = por %p47, %p48
      %s51 = sadd.s32 %s50, 1
      %p54 = scmp.eq.s32.totalorder %s16, 1
      %p55 = scmp.ne.s32.totalorder %s50, %s52
      %p56 = scmp.eq.s32.totalorder %s16, 0
      %p57 = por %p55, %p56
      %p58 = scmp.ne.s32.totalorder %s50, %s52
      %p59 = scmp.eq.s32.totalorder %s21, 1
      %p60 = por %p58, %p59
      %p61 = scmp.ne.s32.totalorder %s52, %s53
      %p62 = scmp.eq.s32.totalorder %s21, 0
      %p63 = por %p61, %p62
      %p64 = scmp.ne.s32.totalorder %s52, %s53
      %p65 = scmp.eq.s32.totalorder %s22, 1
      %p66 = por %p64, %p65
      %p68 = scmp.ne.s32.totalorder %s53, %s67
      %p69 = scmp.eq.s32.totalorder %s22, 0
      %p70 = por %p68, %p69
      %s72 = sadd.s32 %s71, 1
      %p75 = scmp.eq.s32.totalorder %s16, 1
      %p76 = scmp.ne.s32.totalorder %s71, %s73
      %p77 = scmp.eq.s32.totalorder %s16, 0
      %p78 = por %p76, %p77
      %p79 = scmp.ne.s32.totalorder %s71, %s73
      %p80 = scmp.eq.s32.totalorder %s21, 1
      %p81 = por %p79, %p80
      %p82 = scmp.ne.s32.totalorder %s73, %s74
      %p83 = scmp.eq.s32.totalorder %s21, 0
      %p84 = por %p82, %p83
      %p85 = scmp.ne.s32.totalorder %s73, %s74
      %p86 = scmp.eq.s32.totalorder %s22, 1
      %p87 = por %p85, %p86
      %p89 = scmp.ne.s32.totalorder %s74, %s88
      %p90 = scmp.eq.s32.totalorder %s22, 0
      %p91 = por %p89, %p90
      %s93 = sadd.s32 %s92, 1
      %p96 = scmp.eq.s32.totalorder %s16, 1
      %p97 = scmp.ne.s32.totalorder %s92, %s94
      %p98 = scmp.eq.s32.totalorder %s16, 0
      %p99 = por %p97, %p98
      %p100 = scmp.ne.s32.totalorder %s92, %s94
      %p101 = scmp.eq.s32.totalorder %s21, 1
      %p102 = por %p100, %p101
      %p103 = scmp.ne.s32.totalorder %s94, %s95
      %p104 = scmp.eq.s32.totalorder %s21, 0
      %p105 = por %p103, %p104
      %p106 = scmp.ne.s32.totalorder %s94, %s95
      %p107 = scmp.eq.s32.totalorder %s22, 1
      %p108 = por %p106, %p107
      %p110 = scmp.ne.s32.totalorder %s95, %s109
      %p111 = scmp.eq.s32.totalorder %s22, 0
      %p112 = por %p110, %p111
      %s114 = sadd.s32 %s113, 1
      %p117 = scmp.eq.s32.totalorder %s16, 1
      %p118 = scmp.ne.s32.totalorder %s113, %s115
      %p119 = scmp.eq.s32.totalorder %s16, 0
      %p120 = por %p118, %p119
      %p121 = scmp.ne.s32.totalorder %s113, %s115
      %p122 = scmp.eq.s32.totalorder %s21, 1
      %p123 = por %p121, %p122
      %p124 = scmp.ne.s32.totalorder %s115, %s116
      %p125 = scmp.eq.s32.totalorder %s21, 0
      %p126 = por %p124, %p125
      %p127 = scmp.ne.s32.totalorder %s115, %s116
      %p128 = scmp.eq.s32.totalorder %s22, 1
      %p129 = por %p127, %p128
      %p131 = scmp.ne.s32.totalorder %s116, %s130
      %p132 = scmp.eq.s32.totalorder %s22, 0
      %p133 = por %p131, %p132
      %s135 = sadd.s32 %s134, 1
      %p138 = scmp.eq.s32.totalorder %s16, 1
      %p139 = scmp.ne.s32.totalorder %s134, %s136
      %p140 = scmp.eq.s32.totalorder %s16, 0
      %p141 = por %p139, %p140
      %p142 = scmp.ne.s32.totalorder %s134, %s136
      %p143 = scmp.eq.s32.totalorder %s21, 1
      %p144 = por %p142, %p143
      %p145 = scmp.ne.s32.totalorder %s136, %s137
      %p146 = scmp.eq.s32.totalorder %s21, 0
      %p147 = por %p145, %p146
      %p148 = scmp.ne.s32.totalorder %s136, %s137
      %p149 = scmp.eq.s32.totalorder %s22, 1
      %p150 = por %p148, %p149
      %p152 = scmp.ne.s32.totalorder %s137, %s151
      %p153 = scmp.eq.s32.totalorder %s22, 0
      %p154 = por %p152, %p153
      %s156 = sadd.s32 %s155, 1
      %p159 = scmp.eq.s32.totalorder %s16, 1
      %p160 = scmp.ne.s32.totalorder %s155, %s157
      %p161 = scmp.eq.s32.totalorder %s16, 0
      %p162 = por %p160, %p161
      %p163 = scmp.ne.s32.totalorder %s155, %s157
      %p164 = scmp.eq.s32.totalorder %s21, 1
      %p165 = por %p163, %p164
      %p166 = scmp.ne.s32.totalorder %s157, %s158
      %p167 = scmp.eq.s32.totalorder %s21, 0
      %p168 = por %p166, %p167
      %p169 = scmp.ne.s32.totalorder %s157, %s158
      %p170 = scmp.eq.s32.totalorder %s22, 1
      %p171 = por %p169, %p170
      %p173 = scmp.ne.s32.totalorder %s158, %s172
      %p174 = scmp.eq.s32.totalorder %s22, 0
      %p175 = por %p173, %p174
      %s177 = sadd.s32 %s176, 1
      %p180 = scmp.eq.s32.totalorder %s16, 1
      %p181 = scmp.ne.s32.totalorder %s176, %s178
      %p182 = scmp.eq.s32.totalorder %s16, 0
      %p183 = por %p181, %p182
      %p184 = scmp.ne.s32.totalorder %s176, %s178
      %p185 = scmp.eq.s32.totalorder %s21, 1
      %p186 = por %p184, %p185
      %p187 = scmp.ne.s32.totalorder %s178, %s179
      %p188 = scmp.eq.s32.totalorder %s21, 0
      %p189 = por %p187, %p188
      %p190 = scmp.ne.s32.totalorder %s178, %s179
      %p191 = scmp.eq.s32.totalorder %s22, 1
      %p192 = por %p190, %p191
      %p194 = scmp.ne.s32.totalorder %s179, %s193
      %p195 = scmp.eq.s32.totalorder %s22, 0
      %p196 = por %p194, %p195
      %s198 = sadd.s32 %s197, 1
      %p201 = scmp.eq.s32.totalorder %s16, 1
      %p202 = scmp.ne.s32.totalorder %s197, %s199
      %p203 = scmp.eq.s32.totalorder %s16, 0
      %p204 = por %p202, %p203
      %p205 = scmp.ne.s32.totalorder %s197, %s199
      %p206 = scmp.eq.s32.totalorder %s21, 1
      %p207 = por %p205, %p206
      %p208 = scmp.ne.s32.totalorder %s199, %s200
      %p209 = scmp.eq.s32.totalorder %s21, 0
      %p210 = por %p208, %p209
      %p211 = scmp.ne.s32.totalorder %s199, %s200
      %p212 = scmp.eq.s32.totalorder %s22, 1
      %p213 = por %p211, %p212
      %p215 = scmp.ne.s32.totalorder %s200, %s214
      %p216 = scmp.eq.s32.totalorder %s22, 0
      %p217 = por %p215, %p216
      %s218 = ssub.s32 %s16, %s23
      %p219 = scmp.eq.s32.totalorder %s218, 0
      %s221 = sadd.s32 %s220, 1
      %s222 = scalar_select %p219, %s220, %s221
      %p225 = pneg %p219
      %p226 = scmp.eq.s32.totalorder %s16, 1
      %p227 = por %p225, %p226
      %p228 = scmp.ne.s32.totalorder %s220, %s223
      %p229 = scmp.eq.s32.totalorder %s16, 0
      %p230 = por %p228, %p229
      %p231 = scmp.ne.s32.totalorder %s220, %s223
      %p232 = scmp.eq.s32.totalorder %s21, 1
      %p233 = por %p231, %p232
      %p234 = scmp.ne.s32.totalorder %s223, %s224
      %p235 = scmp.eq.s32.totalorder %s21, 0
      %p236 = por %p234, %p235
      %p237 = scmp.ne.s32.totalorder %s223, %s224
      %p238 = scmp.eq.s32.totalorder %s22, 1
      %p239 = por %p237, %p238
      %p241 = scmp.ne.s32.totalorder %s224, %s240
      %p242 = scmp.eq.s32.totalorder %s22, 0
      %p243 = por %p241, %p242
      %p244 = scmp.le.s32.totalorder 1, %s16
      %p245 = scmp.lt.s32.totalorder %s16, 3
      %p246 = pnand %p244, %p245
      %p247 = pneg %p246
      // Predicated region
      $region9: #{new_net_forward.1} parent=5 // pred_check
        _
      $region10: #{new_net_forward.1} parent=5 // pred_check_branch
        %249 = sbr.rel (%p246) target = $region12
      $region11: #{new_net_forward.1} parent=5 // pred_region
        %s250 = ssub.s32 %s16, 1
        // Predicated region
        $region13: #{new_net_forward.1} parent=11 // pred_check
          %p251 = pneg %p63
        $region14: #{new_net_forward.1} parent=11 // pred_check_branch
          %253 = sbr.rel (%p251) target = $region16
        $region15: #{new_net_forward.1} parent=11 // pred_region
          _
        $region16: #{new_net_forward.1} parent=11 // pred_fallthru
          _
        // Predicated region
        $region17: #{new_net_forward.1} parent=11 // pred_check
          %p254 = pneg %p84
        $region18: #{new_net_forward.1} parent=11 // pred_check_branch
          %256 = sbr.rel (%p254) target = $region20
        $region19: #{new_net_forward.1} parent=11 // pred_region
          _
        $region20: #{new_net_forward.1} parent=11 // pred_fallthru
          _
        // Predicated region
        $region21: #{new_net_forward.1} parent=11 // pred_check
          %p257 = pneg %p105
        $region22: #{new_net_forward.1} parent=11 // pred_check_branch
          %259 = sbr.rel (%p257) target = $region24
        $region23: #{new_net_forward.1} parent=11 // pred_region
          _
        $region24: #{new_net_forward.1} parent=11 // pred_fallthru
          _
        // Predicated region
        $region25: #{new_net_forward.1} parent=11 // pred_check
          %p260 = pneg %p126
        $region26: #{new_net_forward.1} parent=11 // pred_check_branch
          %262 = sbr.rel (%p260) target = $region28
        $region27: #{new_net_forward.1} parent=11 // pred_region
          _
        $region28: #{new_net_forward.1} parent=11 // pred_fallthru
          _
        // Predicated region
        $region29: #{new_net_forward.1} parent=11 // pred_check
          %p263 = pneg %p147
        $region30: #{new_net_forward.1} parent=11 // pred_check_branch
          %265 = sbr.rel (%p263) target = $region32
        $region31: #{new_net_forward.1} parent=11 // pred_region
          %s267 = ssub.s32 4096, 4096
          %268 = vsyncadd [#allocation3], %s267
          %s269 = sshll.u32 [#allocation2], 4
          %s270 = int_to_ptr.vmem [resolvable:$true] %s269
          %275 = dma.hbm_to_vmem [thread:$0]  %s5, 4096, %s270, [#allocation3], 128, 128, 8
        $region32: #{new_net_forward.1} parent=11 // pred_fallthru
          _
        // Predicated region
        $region33: #{new_net_forward.1} parent=11 // pred_check
          %p276 = pneg %p168
        $region34: #{new_net_forward.1} parent=11 // pred_check_branch
          %278 = sbr.rel (%p276) target = $region36
        $region35: #{new_net_forward.1} parent=11 // pred_region
          _
        $region36: #{new_net_forward.1} parent=11 // pred_fallthru
          _
        // Predicated region
        $region37: #{new_net_forward.1} parent=11 // pred_check
          %p279 = pneg %p189
        $region38: #{new_net_forward.1} parent=11 // pred_check_branch
          %281 = sbr.rel (%p279) target = $region40
        $region39: #{new_net_forward.1} parent=11 // pred_region
          _
        $region40: #{new_net_forward.1} parent=11 // pred_fallthru
          _
        // Predicated region
        $region41: #{new_net_forward.1} parent=11 // pred_check
          %p282 = pneg %p210
        $region42: #{new_net_forward.1} parent=11 // pred_check_branch
          %284 = sbr.rel (%p282) target = $region44
        $region43: #{new_net_forward.1} parent=11 // pred_region
          _
        $region44: #{new_net_forward.1} parent=11 // pred_fallthru
          _
      $region12: #{new_net_forward.1} parent=5 // pred_fallthru
        _
      %p285 = scmp.lt.s32.totalorder %s16, 2
      // Predicated region
      $region45: #{new_net_forward.1} parent=5 // pred_check
        %p286 = pneg %p285
      $region46: #{new_net_forward.1} parent=5 // pred_check_branch
        %288 = sbr.rel (%p286) target = $region48
      $region47: #{new_net_forward.1} parent=5 // pred_region
        // Predicated region
        $region49: #{new_net_forward.1} parent=47 // pred_check
          %p289 = pneg %p36
        $region50: #{new_net_forward.1} parent=47 // pred_check_branch
          %291 = sbr.rel (%p289) target = $region52
        $region51: #{new_net_forward.1} parent=47 // pred_region
          %s292 = smul.u32 8, %s16
          %p293 = scmp.lt.s32.totalorder %s292, 15
          %s294 = scalar_select %p293, %s292, 15
          %s295 = smul.addr %s294, 8
          %s296 = scalar_lea.vmem %s0, %s295
          %s297 = smul.u32 8, %s16
        $region52: #{new_net_forward.1} parent=47 // pred_fallthru
          _
      $region48: #{new_net_forward.1} parent=5 // pred_fallthru
        _
      %p298 = scmp.le.s32.totalorder 1, %s16
      %p299 = scmp.lt.s32.totalorder %s16, 3
      %p300 = pnand %p298, %p299
      %p301 = pneg %p300
      // Predicated region
      $region53: #{new_net_forward.1} parent=5 // pred_check
        _
      $region54: #{new_net_forward.1} parent=5 // pred_check_branch
        %303 = sbr.rel (%p300) target = $region56
      $region55: #{new_net_forward.1} parent=5 // pred_region
        %s304 = ssub.s32 %s16, 1
        // Predicated region
        $region57: #{new_net_forward.1} parent=55 // pred_check
          %p305 = pneg %p147
        $region58: #{new_net_forward.1} parent=55 // pred_check_branch
          %307 = sbr.rel (%p305) target = $region60
        $region59: #{new_net_forward.1} parent=55 // pred_region
          %308 = dma.done [#allocation3], 4096
        $region60: #{new_net_forward.1} parent=55 // pred_fallthru
          _
        %s309 = smul.u32 8, %s21
        %p310 = scmp.lt.s32.totalorder %s309, 15
        %s311 = scalar_select %p310, %s309, 15
        %s312 = smul.addr %s311, 8
        %s313 = scalar_lea.vmem %s0, %s312
        %p314 = pneg %p42
        %p315 = pneg %p39
        %p316 = pneg %p63
        %p317 = pneg %p60
        %p318 = pneg %p84
        %p319 = pneg %p81
        %p320 = pneg %p105
        %p321 = pneg %p102
        %p322 = pneg %p126
        %p323 = pneg %p123
        %p324 = pneg %p147
        %p325 = pneg %p144
        %p326 = pneg %p168
        %p327 = pneg %p165
        %p328 = pneg %p189
        %p329 = pneg %p186
        %p330 = pneg %p210
        %p331 = pneg %p207
        %p332 = pneg %p236
        %p333 = pneg %p233
        %s334 = smul.u32 8, %s21
        %p335 = scmp.lt.s32.totalorder %s334, 15
        %s336 = scalar_select %p335, %s334, 15
        %s337 = smul.addr %s336, 8
        %s338 = scalar_lea.vmem %s9, %s337
        %s339 = smul.u32 8, %s21
        %p340 = scmp.lt.s32.totalorder %s339, 15
        %s341 = scalar_select %p340, %s339, 15
        %s342 = smul.addr %s341, 8
        %s343 = scalar_lea.vmem %s0, %s342
        %s344 = smul.u32 8, %s21
        %s345 = smul.u32 8, %s21
        %p346 = scmp.lt.s32.totalorder %s345, 15
        %s347 = scalar_select %p346, %s345, 15
        %s348 = smul.addr %s347, 8
        %s349 = scalar_lea.vmem %s9, %s348
        %s350 = smul.u32 8, %s21
        %v352 = vld [vmem:[%s343] sm:$0xff]
        %v353 = vld [vmem:[%s343 + $0x8] sm:$0xff]
        %v354 = vld [vmem:[%s343 + $0x10] sm:$0xff]
        %v355 = vld [vmem:[%s343 + $0x18] sm:$0xff]
        %v356 = vld [vmem:[%s343 + $0x20] sm:$0xff]
        %v357 = vld [vmem:[%s343 + $0x28] sm:$0xff]
        %v358 = vld [vmem:[%s343 + $0x30] sm:$0xff]
        %v359 = vld [vmem:[%s343 + $0x38] sm:$0xff]
        %v360 = vpack.c.bf16 %v353, %v352
        %v361 = vpack.c.bf16 %v355, %v354
        %v362 = vpack.c.bf16 %v357, %v356
        %v363 = vpack.c.bf16 %v359, %v358
        %v364 = vld [vmem:[%s1] sm:$0x77]
        %v365 = vld [vmem:[%s2] sm:$0x3]
        %v367 = vlaneseq
        %v368 = vshrl.u32 %v367, 7
        %v369 = vsub.s32 0, %v368
        %v370 = vrot.slane %v365, %v369
        %v371 = vlaneseq
        %v372 = vshrl.u32 %v371, 7
        %v373 = vsub.s32 1, %v372
        %v374 = vrot.slane %v365, %v373
        %v378 = vunpack.c.l.b16 %v364
        %v379 = vunpack.c.h.b16 %v364
        %v380 = vpack.c.b16 %v378, %v378
        %v381 = vpack.c.b16 %v379, %v379
        %vm382 = vcmask 48128
        %v384 = vsel %vm382, %v360, 0
        %v387 = vsel %vm382, %v361, 0
        %v390 = vsel %vm382, %v362, 0
        %v393 = vsel %vm382, %v363, 0
        %vm395 = vcmask 1042432
        %v397 = vsel %vm395, %v380, 0
        %v400 = vsel %vm395, %v381, 0
        %402 = vmatprep.subr.bf16.mxu0 %v400
        %403 = vmatpush1.bf16.msra.mxu0 %v397
        %404 = vmatprep.subr.bf16.mxu0 0
        %405 = vmatpush1.bf16.msra.mxu0 0
        %406 = vmatprep.subr.bf16.mxu0 0
        %407 = vmatpush1.bf16.msra.mxu0 0
        %408 = vmatprep.subr.bf16.mxu0 0
        %409 = vmatpush1.bf16.msra.mxu0 0
        %410 = vmatprep.subr.bf16.mxu0 0
        %411 = vmatpush1.bf16.msra.mxu0 0
        %412 = vmatprep.subr.bf16.mxu0 0
        %413 = vmatpush1.bf16.msra.mxu0 0
        %414 = vmatprep.subr.bf16.mxu0 0
        %415 = vmatpush1.bf16.msra.mxu0 0
        %416 = vmatprep.subr.bf16.mxu0 0
        %417 = vmatpush1.bf16.msra.mxu0 0
        %418 = vmatprep.subr.bf16.mxu0 0
        %419 = vmatpush1.bf16.msra.mxu0 0
        %420 = vmatprep.subr.bf16.mxu0 0
        %421 = vmatpush1.bf16.msra.mxu0 0
        %422 = vmatprep.subr.bf16.mxu0 0
        %423 = vmatpush1.bf16.msra.mxu0 0
        %424 = vmatprep.subr.bf16.mxu0 0
        %425 = vmatpush1.bf16.msra.mxu0 0
        %426 = vmatprep.subr.bf16.mxu0 0
        %427 = vmatpush1.bf16.msra.mxu0 0
        %428 = vmatprep.subr.bf16.mxu0 0
        %429 = vmatpush1.bf16.msra.mxu0 0
        %430 = vmatprep.subr.bf16.mxu0 0
        %431 = vmatpush1.bf16.msra.mxu0 0
        %432 = vmatprep.subr.bf16.mxu0 0
        %433 = vmatpush1.bf16.msra.mxu0 0
        %434 = vmatprep.mubr.bf16.mxu0 0
        %435 = vmatmul.mubr.bf16.gmra.mrb[0].mxu0 %v384
        %v436 = vpop.f32.mrb[0].mxu0
        %v437 = vadd.f32 %v370, %v436
        %v438 = vpop.f32.mrb[0].mxu0
        %v439 = vadd.f32 %v374, %v438
        %v440 = vpop.f32.mrb[0].mxu0
        %v441 = vadd.f32 %v370, %v440
        %v442 = vpop.f32.mrb[0].mxu0
        %v443 = vadd.f32 %v374, %v442
        %444 = vmatprep.mubr.bf16.mxu0 0
        %445 = vmatmul.mubr.bf16.gmra.mrb[0].mxu0 %v387
        %v446 = vpop.f32.mrb[0].mxu0
        %v447 = vadd.f32 %v370, %v446
        %v448 = vpop.f32.mrb[0].mxu0
        %v449 = vadd.f32 %v374, %v448
        %v450 = vpop.f32.mrb[0].mxu0
        %v451 = vadd.f32 %v370, %v450
        %v452 = vpop.f32.mrb[0].mxu0
        %v453 = vadd.f32 %v374, %v452
        %454 = vmatprep.mubr.bf16.mxu0 0
        %455 = vmatmul.mubr.bf16.gmra.mrb[0].mxu0 %v390
        %v456 = vpop.f32.mrb[0].mxu0
        %v457 = vadd.f32 %v370, %v456
        %v458 = vpop.f32.mrb[0].mxu0
        %v459 = vadd.f32 %v374, %v458
        %v460 = vpop.f32.mrb[0].mxu0
        %v461 = vadd.f32 %v370, %v460
        %v462 = vpop.f32.mrb[0].mxu0
        %v463 = vadd.f32 %v374, %v462
        %464 = vmatprep.mubr.bf16.mxu0 0
        %465 = vmatmul.mubr.bf16.gmra.mrb[0].mxu0 %v393
        %v466 = vpop.f32.mrb[0].mxu0
        %v467 = vadd.f32 %v370, %v466
        %v468 = vpop.f32.mrb[0].mxu0
        %v469 = vadd.f32 %v374, %v468
        %v470 = vpop.f32.mrb[0].mxu0
        %v471 = vadd.f32 %v370, %v470
        %v472 = vpop.f32.mrb[0].mxu0
        %v473 = vadd.f32 %v374, %v472
        %474 = vdwg.mxu0
        %v475 = vpack.c.bf16 %v441, %v437
        %v476 = vpack.c.bf16 %v443, %v439
        %v477 = vpack.c.bf16 %v451, %v447
        %v478 = vpack.c.bf16 %v453, %v449
        %v479 = vpack.c.bf16 %v461, %v457
        %v480 = vpack.c.bf16 %v463, %v459
        %v481 = vpack.c.bf16 %v471, %v467
        %v482 = vpack.c.bf16 %v473, %v469
        %v483 = vmax.bf16 %v475, 0
        %v484 = vmax.bf16 %v476, 0
        %v485 = vmax.bf16 %v477, 0
        %v486 = vmax.bf16 %v478, 0
        %v487 = vmax.bf16 %v479, 0
        %v488 = vmax.bf16 %v480, 0
        %v489 = vmax.bf16 %v481, 0
        %v490 = vmax.bf16 %v482, 0
        %v491 = vld [vmem:[%s3] sm:$0xff]
        %v492 = vld [vmem:[%s3 + $0x8] sm:$0xff]
        %v493 = vld [vmem:[%s3 + $0x10] sm:$0xff]
        %v494 = vld [vmem:[%s3 + $0x18] sm:$0xff]
        %v495 = vld [vmem:[%s3 + $0x20] sm:$0xff]
        %v496 = vld [vmem:[%s3 + $0x28] sm:$0xff]
        %v497 = vld [vmem:[%s3 + $0x30] sm:$0xff]
        %v498 = vld [vmem:[%s3 + $0x38] sm:$0xff]
        %v499 = vld [vmem:[%s3 + $0x40] sm:$0xff]
        %v500 = vld [vmem:[%s3 + $0x48] sm:$0xff]
        %v501 = vld [vmem:[%s3 + $0x50] sm:$0xff]
        %v502 = vld [vmem:[%s3 + $0x58] sm:$0xff]
        %v503 = vld [vmem:[%s3 + $0x60] sm:$0xff]
        %v504 = vld [vmem:[%s3 + $0x68] sm:$0xff]
        %v505 = vld [vmem:[%s3 + $0x70] sm:$0xff]
        %v506 = vld [vmem:[%s3 + $0x78] sm:$0xff]
        %v507 = vld [vmem:[%s3 + $0x80] sm:$0xff]
        %v508 = vld [vmem:[%s3 + $0x88] sm:$0xff]
        %v509 = vld [vmem:[%s3 + $0x90] sm:$0xff]
        %v510 = vld [vmem:[%s3 + $0x98] sm:$0xff]
        %v511 = vld [vmem:[%s3 + $0xa0] sm:$0xff]
        %v512 = vld [vmem:[%s3 + $0xa8] sm:$0xff]
        %v513 = vld [vmem:[%s3 + $0xb0] sm:$0xff]
        %v514 = vld [vmem:[%s3 + $0xb8] sm:$0xff]
        %v515 = vld [vmem:[%s3 + $0xc0] sm:$0xff]
        %v516 = vld [vmem:[%s3 + $0xc8] sm:$0xff]
        %v517 = vld [vmem:[%s3 + $0xd0] sm:$0xff]
        %v518 = vld [vmem:[%s3 + $0xd8] sm:$0xff]
        %v519 = vld [vmem:[%s3 + $0xe0] sm:$0xff]
        %v520 = vld [vmem:[%s3 + $0xe8] sm:$0xff]
        %v521 = vld [vmem:[%s3 + $0xf0] sm:$0xff]
        %v522 = vld [vmem:[%s3 + $0xf8] sm:$0xff]
        %v523 = vld [vmem:[%s4] sm:$0x3]
        %v525 = vlaneseq
        %v526 = vshrl.u32 %v525, 7
        %v527 = vsub.s32 0, %v526
        %v528 = vrot.slane %v523, %v527
        %v529 = vlaneseq
        %v530 = vshrl.u32 %v529, 7
        %v531 = vsub.s32 1, %v530
        %v532 = vrot.slane %v523, %v531
        %v567 = vunpack.c.l.b16 %v491
        %v568 = vunpack.c.h.b16 %v491
        %v569 = vunpack.c.l.b16 %v492
        %v570 = vunpack.c.h.b16 %v492
        %v571 = vunpack.c.l.b16 %v493
        %v572 = vunpack.c.h.b16 %v493
        %v573 = vunpack.c.l.b16 %v494
        %v574 = vunpack.c.h.b16 %v494
        %v575 = vunpack.c.l.b16 %v495
        %v576 = vunpack.c.h.b16 %v495
        %v577 = vunpack.c.l.b16 %v496
        %v578 = vunpack.c.h.b16 %v496
        %v579 = vunpack.c.l.b16 %v497
        %v580 = vunpack.c.h.b16 %v497
        %v581 = vunpack.c.l.b16 %v498
        %v582 = vunpack.c.h.b16 %v498
        %v583 = vunpack.c.l.b16 %v499
        %v584 = vunpack.c.h.b16 %v499
        %v585 = vunpack.c.l.b16 %v500
        %v586 = vunpack.c.h.b16 %v500
        %v587 = vunpack.c.l.b16 %v501
        %v588 = vunpack.c.h.b16 %v501
        %v589 = vunpack.c.l.b16 %v502
        %v590 = vunpack.c.h.b16 %v502
        %v591 = vunpack.c.l.b16 %v503
        %v592 = vunpack.c.h.b16 %v503
        %v593 = vunpack.c.l.b16 %v504
        %v594 = vunpack.c.h.b16 %v504
        %v595 = vunpack.c.l.b16 %v505
        %v596 = vunpack.c.h.b16 %v505
        %v597 = vunpack.c.l.b16 %v506
        %v598 = vunpack.c.h.b16 %v506
        %v599 = vunpack.c.l.b16 %v507
        %v600 = vunpack.c.h.b16 %v507
        %v601 = vunpack.c.l.b16 %v508
        %v602 = vunpack.c.h.b16 %v508
        %v603 = vunpack.c.l.b16 %v509
        %v604 = vunpack.c.h.b16 %v509
        %v605 = vunpack.c.l.b16 %v510
        %v606 = vunpack.c.h.b16 %v510
        %v607 = vunpack.c.l.b16 %v511
        %v608 = vunpack.c.h.b16 %v511
        %v609 = vunpack.c.l.b16 %v512
        %v610 = vunpack.c.h.b16 %v512
        %v611 = vunpack.c.l.b16 %v513
        %v612 = vunpack.c.h.b16 %v513
        %v613 = vunpack.c.l.b16 %v514
        %v614 = vunpack.c.h.b16 %v514
        %v615 = vunpack.c.l.b16 %v515
        %v616 = vunpack.c.h.b16 %v515
        %v617 = vunpack.c.l.b16 %v516
        %v618 = vunpack.c.h.b16 %v516
        %v619 = vunpack.c.l.b16 %v517
        %v620 = vunpack.c.h.b16 %v517
        %v621 = vunpack.c.l.b16 %v518
        %v622 = vunpack.c.h.b16 %v518
        %v623 = vunpack.c.l.b16 %v519
        %v624 = vunpack.c.h.b16 %v519
        %v625 = vunpack.c.l.b16 %v520
        %v626 = vunpack.c.h.b16 %v520
        %v627 = vunpack.c.l.b16 %v521
        %v628 = vunpack.c.h.b16 %v521
        %v629 = vunpack.c.l.b16 %v522
        %v630 = vunpack.c.h.b16 %v522
        %v631 = vpack.c.b16 %v569, %v567
        %v632 = vpack.c.b16 %v570, %v568
        %v633 = vpack.c.b16 %v573, %v571
        %v634 = vpack.c.b16 %v574, %v572
        %v635 = vpack.c.b16 %v577, %v575
        %v636 = vpack.c.b16 %v578, %v576
        %v637 = vpack.c.b16 %v581, %v579
        %v638 = vpack.c.b16 %v582, %v580
        %v639 = vpack.c.b16 %v585, %v583
        %v640 = vpack.c.b16 %v586, %v584
        %v641 = vpack.c.b16 %v589, %v587
        %v642 = vpack.c.b16 %v590, %v588
        %v643 = vpack.c.b16 %v593, %v591
        %v644 = vpack.c.b16 %v594, %v592
        %v645 = vpack.c.b16 %v597, %v595
        %v646 = vpack.c.b16 %v598, %v596
        %v647 = vpack.c.b16 %v601, %v599
        %v648 = vpack.c.b16 %v602, %v600
        %v649 = vpack.c.b16 %v605, %v603
        %v650 = vpack.c.b16 %v606, %v604
        %v651 = vpack.c.b16 %v609, %v607
        %v652 = vpack.c.b16 %v610, %v608
        %v653 = vpack.c.b16 %v613, %v611
        %v654 = vpack.c.b16 %v614, %v612
        %v655 = vpack.c.b16 %v617, %v615
        %v656 = vpack.c.b16 %v618, %v616
        %v657 = vpack.c.b16 %v621, %v619
        %v658 = vpack.c.b16 %v622, %v620
        %v659 = vpack.c.b16 %v625, %v623
        %v660 = vpack.c.b16 %v626, %v624
        %v661 = vpack.c.b16 %v629, %v627
        %v662 = vpack.c.b16 %v630, %v628
        %695 = vmatprep.subr.bf16.mxu0 %v632
        %696 = vmatpush1.bf16.msra.mxu0 %v631
        %697 = vmatprep.subr.bf16.mxu0 %v634
        %698 = vmatpush1.bf16.msra.mxu0 %v633
        %699 = vmatprep.subr.bf16.mxu0 %v636
        %700 = vmatpush1.bf16.msra.mxu0 %v635
        %701 = vmatprep.subr.bf16.mxu0 %v638
        %702 = vmatpush1.bf16.msra.mxu0 %v637
        %703 = vmatprep.subr.bf16.mxu0 %v640
        %704 = vmatpush1.bf16.msra.mxu0 %v639
        %705 = vmatprep.subr.bf16.mxu0 %v642
        %706 = vmatpush1.bf16.msra.mxu0 %v641
        %707 = vmatprep.subr.bf16.mxu0 %v644
        %708 = vmatpush1.bf16.msra.mxu0 %v643
        %709 = vmatprep.subr.bf16.mxu0 %v646
        %710 = vmatpush1.bf16.msra.mxu0 %v645
        %711 = vmatprep.subr.bf16.mxu0 %v648
        %712 = vmatpush1.bf16.msra.mxu0 %v647
        %713 = vmatprep.subr.bf16.mxu0 %v650
        %714 = vmatpush1.bf16.msra.mxu0 %v649
        %715 = vmatprep.subr.bf16.mxu0 %v652
        %716 = vmatpush1.bf16.msra.mxu0 %v651
        %717 = vmatprep.subr.bf16.mxu0 %v654
        %718 = vmatpush1.bf16.msra.mxu0 %v653
        %719 = vmatprep.subr.bf16.mxu0 %v656
        %720 = vmatpush1.bf16.msra.mxu0 %v655
        %721 = vmatprep.subr.bf16.mxu0 %v658
        %722 = vmatpush1.bf16.msra.mxu0 %v657
        %723 = vmatprep.subr.bf16.mxu0 %v660
        %724 = vmatpush1.bf16.msra.mxu0 %v659
        %725 = vmatprep.subr.bf16.mxu0 %v662
        %726 = vmatpush1.bf16.msra.mxu0 %v661
        %727 = vmatprep.mubr.bf16.mxu0 %v484
        %728 = vmatmul.mubr.bf16.gmra.mrb[0].mxu0 %v483
        %v729 = vpop.f32.mrb[0].mxu0
        %v730 = vadd.f32 %v528, %v729
        %v731 = vpop.f32.mrb[0].mxu0
        %v732 = vadd.f32 %v532, %v731
        %v733 = vpop.f32.mrb[0].mxu0
        %v734 = vadd.f32 %v528, %v733
        %v735 = vpop.f32.mrb[0].mxu0
        %v736 = vadd.f32 %v532, %v735
        %737 = vmatprep.mubr.bf16.mxu0 %v486
        %738 = vmatmul.mubr.bf16.gmra.mrb[0].mxu0 %v485
        %v739 = vpop.f32.mrb[0].mxu0
        %v740 = vadd.f32 %v528, %v739
        %v741 = vpop.f32.mrb[0].mxu0
        %v742 = vadd.f32 %v532, %v741
        %v743 = vpop.f32.mrb[0].mxu0
        %v744 = vadd.f32 %v528, %v743
        %v745 = vpop.f32.mrb[0].mxu0
        %v746 = vadd.f32 %v532, %v745
        %747 = vmatprep.mubr.bf16.mxu0 %v488
        %748 = vmatmul.mubr.bf16.gmra.mrb[0].mxu0 %v487
        %v749 = vpop.f32.mrb[0].mxu0
        %v750 = vadd.f32 %v528, %v749
        %v751 = vpop.f32.mrb[0].mxu0
        %v752 = vadd.f32 %v532, %v751
        %v753 = vpop.f32.mrb[0].mxu0
        %v754 = vadd.f32 %v528, %v753
        %v755 = vpop.f32.mrb[0].mxu0
        %v756 = vadd.f32 %v532, %v755
        %757 = vmatprep.mubr.bf16.mxu0 %v490
        %758 = vmatmul.mubr.bf16.gmra.mrb[0].mxu0 %v489
        %v759 = vpop.f32.mrb[0].mxu0
        %v760 = vadd.f32 %v528, %v759
        %v761 = vpop.f32.mrb[0].mxu0
        %v762 = vadd.f32 %v532, %v761
        %v763 = vpop.f32.mrb[0].mxu0
        %v764 = vadd.f32 %v528, %v763
        %v765 = vpop.f32.mrb[0].mxu0
        %v766 = vadd.f32 %v532, %v765
        %767 = vdwg.mxu0
        %v768 = vpack.c.bf16 %v734, %v730
        %v769 = vpack.c.bf16 %v736, %v732
        %v770 = vpack.c.bf16 %v744, %v740
        %v771 = vpack.c.bf16 %v746, %v742
        %v772 = vpack.c.bf16 %v754, %v750
        %v773 = vpack.c.bf16 %v756, %v752
        %v774 = vpack.c.bf16 %v764, %v760
        %v775 = vpack.c.bf16 %v766, %v762
        %v776 = vmax.bf16 %v768, 0
        %v777 = vmax.bf16 %v769, 0
        %v778 = vmax.bf16 %v770, 0
        %v779 = vmax.bf16 %v771, 0
        %v780 = vmax.bf16 %v772, 0
        %v781 = vmax.bf16 %v773, 0
        %v782 = vmax.bf16 %v774, 0
        %v783 = vmax.bf16 %v775, 0
        %v784 = vld [vmem:[#allocation2] sm:$0xff]
        %v785 = vld [vmem:[#allocation2 + $0x8] sm:$0xff]
        %v786 = vld [vmem:[#allocation2 + $0x10] sm:$0xff]
        %v787 = vld [vmem:[#allocation2 + $0x18] sm:$0xff]
        %v788 = vld [vmem:[#allocation2 + $0x20] sm:$0xff]
        %v789 = vld [vmem:[#allocation2 + $0x28] sm:$0xff]
        %v790 = vld [vmem:[#allocation2 + $0x30] sm:$0xff]
        %v791 = vld [vmem:[#allocation2 + $0x38] sm:$0xff]
        %v792 = vld [vmem:[#allocation2 + $0x40] sm:$0xff]
        %v793 = vld [vmem:[#allocation2 + $0x48] sm:$0xff]
        %v794 = vld [vmem:[#allocation2 + $0x50] sm:$0xff]
        %v795 = vld [vmem:[#allocation2 + $0x58] sm:$0xff]
        %v796 = vld [vmem:[#allocation2 + $0x60] sm:$0xff]
        %v797 = vld [vmem:[#allocation2 + $0x68] sm:$0xff]
        %v798 = vld [vmem:[#allocation2 + $0x70] sm:$0xff]
        %v799 = vld [vmem:[#allocation2 + $0x78] sm:$0xff]
        %v800 = vld [vmem:[#allocation2 + $0x80] sm:$0xff]
        %v801 = vld [vmem:[#allocation2 + $0x88] sm:$0xff]
        %v802 = vld [vmem:[#allocation2 + $0x90] sm:$0xff]
        %v803 = vld [vmem:[#allocation2 + $0x98] sm:$0xff]
        %v804 = vld [vmem:[#allocation2 + $0xa0] sm:$0xff]
        %v805 = vld [vmem:[#allocation2 + $0xa8] sm:$0xff]
        %v806 = vld [vmem:[#allocation2 + $0xb0] sm:$0xff]
        %v807 = vld [vmem:[#allocation2 + $0xb8] sm:$0xff]
        %v808 = vld [vmem:[#allocation2 + $0xc0] sm:$0xff]
        %v809 = vld [vmem:[#allocation2 + $0xc8] sm:$0xff]
        %v810 = vld [vmem:[#allocation2 + $0xd0] sm:$0xff]
        %v811 = vld [vmem:[#allocation2 + $0xd8] sm:$0xff]
        %v812 = vld [vmem:[#allocation2 + $0xe0] sm:$0xff]
        %v813 = vld [vmem:[#allocation2 + $0xe8] sm:$0xff]
        %v814 = vld [vmem:[#allocation2 + $0xf0] sm:$0xff]
        %v815 = vld [vmem:[#allocation2 + $0xf8] sm:$0xff]
        %v816 = vld [vmem:[%s6] sm:$0x3]
        %v818 = vlaneseq
        %v819 = vshrl.u32 %v818, 7
        %v820 = vsub.s32 0, %v819
        %v821 = vrot.slane %v816, %v820
        %v822 = vlaneseq
        %v823 = vshrl.u32 %v822, 7
        %v824 = vsub.s32 1, %v823
        %v825 = vrot.slane %v816, %v824
        %v860 = vunpack.c.l.b16 %v784
        %v861 = vunpack.c.h.b16 %v784
        %v862 = vunpack.c.l.b16 %v785
        %v863 = vunpack.c.h.b16 %v785
        %v864 = vunpack.c.l.b16 %v786
        %v865 = vunpack.c.h.b16 %v786
        %v866 = vunpack.c.l.b16 %v787
        %v867 = vunpack.c.h.b16 %v787
        %v868 = vunpack.c.l.b16 %v788
        %v869 = vunpack.c.h.b16 %v788
        %v870 = vunpack.c.l.b16 %v789
        %v871 = vunpack.c.h.b16 %v789
        %v872 = vunpack.c.l.b16 %v790
        %v873 = vunpack.c.h.b16 %v790
        %v874 = vunpack.c.l.b16 %v791
        %v875 = vunpack.c.h.b16 %v791
        %v876 = vunpack.c.l.b16 %v792
        %v877 = vunpack.c.h.b16 %v792
        %v878 = vunpack.c.l.b16 %v793
        %v879 = vunpack.c.h.b16 %v793
        %v880 = vunpack.c.l.b16 %v794
        %v881 = vunpack.c.h.b16 %v794
        %v882 = vunpack.c.l.b16 %v795
        %v883 = vunpack.c.h.b16 %v795
        %v884 = vunpack.c.l.b16 %v796
        %v885 = vunpack.c.h.b16 %v796
        %v886 = vunpack.c.l.b16 %v797
        %v887 = vunpack.c.h.b16 %v797
        %v888 = vunpack.c.l.b16 %v798
        %v889 = vunpack.c.h.b16 %v798
        %v890 = vunpack.c.l.b16 %v799
        %v891 = vunpack.c.h.b16 %v799
        %v892 = vunpack.c.l.b16 %v800
        %v893 = vunpack.c.h.b16 %v800
        %v894 = vunpack.c.l.b16 %v801
        %v895 = vunpack.c.h.b16 %v801
        %v896 = vunpack.c.l.b16 %v802
        %v897 = vunpack.c.h.b16 %v802
        %v898 = vunpack.c.l.b16 %v803
        %v899 = vunpack.c.h.b16 %v803
        %v900 = vunpack.c.l.b16 %v804
        %v901 = vunpack.c.h.b16 %v804
        %v902 = vunpack.c.l.b16 %v805
        %v903 = vunpack.c.h.b16 %v805
        %v904 = vunpack.c.l.b16 %v806
        %v905 = vunpack.c.h.b16 %v806
        %v906 = vunpack.c.l.b16 %v807
        %v907 = vunpack.c.h.b16 %v807
        %v908 = vunpack.c.l.b16 %v808
        %v909 = vunpack.c.h.b16 %v808
        %v910 = vunpack.c.l.b16 %v809
        %v911 = vunpack.c.h.b16 %v809
        %v912 = vunpack.c.l.b16 %v810
        %v913 = vunpack.c.h.b16 %v810
        %v914 = vunpack.c.l.b16 %v811
        %v915 = vunpack.c.h.b16 %v811
        %v916 = vunpack.c.l.b16 %v812
        %v917 = vunpack.c.h.b16 %v812
        %v918 = vunpack.c.l.b16 %v813
        %v919 = vunpack.c.h.b16 %v813
        %v920 = vunpack.c.l.b16 %v814
        %v921 = vunpack.c.h.b16 %v814
        %v922 = vunpack.c.l.b16 %v815
        %v923 = vunpack.c.h.b16 %v815
        %v924 = vpack.c.b16 %v862, %v860
        %v925 = vpack.c.b16 %v863, %v861
        %v926 = vpack.c.b16 %v866, %v864
        %v927 = vpack.c.b16 %v867, %v865
        %v928 = vpack.c.b16 %v870, %v868
        %v929 = vpack.c.b16 %v871, %v869
        %v930 = vpack.c.b16 %v874, %v872
        %v931 = vpack.c.b16 %v875, %v873
        %v932 = vpack.c.b16 %v878, %v876
        %v933 = vpack.c.b16 %v879, %v877
        %v934 = vpack.c.b16 %v882, %v880
        %v935 = vpack.c.b16 %v883, %v881
        %v936 = vpack.c.b16 %v886, %v884
        %v937 = vpack.c.b16 %v887, %v885
        %v938 = vpack.c.b16 %v890, %v888
        %v939 = vpack.c.b16 %v891, %v889
        %v940 = vpack.c.b16 %v894, %v892
        %v941 = vpack.c.b16 %v895, %v893
        %v942 = vpack.c.b16 %v898, %v896
        %v943 = vpack.c.b16 %v899, %v897
        %v944 = vpack.c.b16 %v902, %v900
        %v945 = vpack.c.b16 %v903, %v901
        %v946 = vpack.c.b16 %v906, %v904
        %v947 = vpack.c.b16 %v907, %v905
        %v948 = vpack.c.b16 %v910, %v908
        %v949 = vpack.c.b16 %v911, %v909
        %v950 = vpack.c.b16 %v914, %v912
        %v951 = vpack.c.b16 %v915, %v913
        %v952 = vpack.c.b16 %v918, %v916
        %v953 = vpack.c.b16 %v919, %v917
        %v954 = vpack.c.b16 %v922, %v920
        %v955 = vpack.c.b16 %v923, %v921
        %988 = vmatprep.subr.bf16.mxu0 %v925
        %989 = vmatpush1.bf16.msra.mxu0 %v924
        %990 = vmatprep.subr.bf16.mxu0 %v927
        %991 = vmatpush1.bf16.msra.mxu0 %v926
        %992 = vmatprep.subr.bf16.mxu0 %v929
        %993 = vmatpush1.bf16.msra.mxu0 %v928
        %994 = vmatprep.subr.bf16.mxu0 %v931
        %995 = vmatpush1.bf16.msra.mxu0 %v930
        %996 = vmatprep.subr.bf16.mxu0 %v933
        %997 = vmatpush1.bf16.msra.mxu0 %v932
        %998 = vmatprep.subr.bf16.mxu0 %v935
        %999 = vmatpush1.bf16.msra.mxu0 %v934
        %1000 = vmatprep.subr.bf16.mxu0 %v937
        %1001 = vmatpush1.bf16.msra.mxu0 %v936
        %1002 = vmatprep.subr.bf16.mxu0 %v939
        %1003 = vmatpush1.bf16.msra.mxu0 %v938
        %1004 = vmatprep.subr.bf16.mxu0 %v941
        %1005 = vmatpush1.bf16.msra.mxu0 %v940
        %1006 = vmatprep.subr.bf16.mxu0 %v943
        %1007 = vmatpush1.bf16.msra.mxu0 %v942
        %1008 = vmatprep.subr.bf16.mxu0 %v945
        %1009 = vmatpush1.bf16.msra.mxu0 %v944
        %1010 = vmatprep.subr.bf16.mxu0 %v947
        %1011 = vmatpush1.bf16.msra.mxu0 %v946
        %1012 = vmatprep.subr.bf16.mxu0 %v949
        %1013 = vmatpush1.bf16.msra.mxu0 %v948
        %1014 = vmatprep.subr.bf16.mxu0 %v951
        %1015 = vmatpush1.bf16.msra.mxu0 %v950
        %1016 = vmatprep.subr.bf16.mxu0 %v953
        %1017 = vmatpush1.bf16.msra.mxu0 %v952
        %1018 = vmatprep.subr.bf16.mxu0 %v955
        %1019 = vmatpush1.bf16.msra.mxu0 %v954
        %1020 = vmatprep.mubr.bf16.mxu0 %v777
        %1021 = vmatmul.mubr.bf16.gmra.mrb[0].mxu0 %v776
        %v1022 = vpop.f32.mrb[0].mxu0
        %v1023 = vadd.f32 %v821, %v1022
        %v1024 = vpop.f32.mrb[0].mxu0
        %v1025 = vadd.f32 %v825, %v1024
        %v1026 = vpop.f32.mrb[0].mxu0
        %v1027 = vadd.f32 %v821, %v1026
        %v1028 = vpop.f32.mrb[0].mxu0
        %v1029 = vadd.f32 %v825, %v1028
        %1030 = vmatprep.mubr.bf16.mxu0 %v779
        %1031 = vmatmul.mubr.bf16.gmra.mrb[0].mxu0 %v778
        %v1032 = vpop.f32.mrb[0].mxu0
        %v1033 = vadd.f32 %v821, %v1032
        %v1034 = vpop.f32.mrb[0].mxu0
        %v1035 = vadd.f32 %v825, %v1034
        %v1036 = vpop.f32.mrb[0].mxu0
        %v1037 = vadd.f32 %v821, %v1036
        %v1038 = vpop.f32.mrb[0].mxu0
        %v1039 = vadd.f32 %v825, %v1038
        %1040 = vmatprep.mubr.bf16.mxu0 %v781
        %1041 = vmatmul.mubr.bf16.gmra.mrb[0].mxu0 %v780
        %v1042 = vpop.f32.mrb[0].mxu0
        %v1043 = vadd.f32 %v821, %v1042
        %v1044 = vpop.f32.mrb[0].mxu0
        %v1045 = vadd.f32 %v825, %v1044
        %v1046 = vpop.f32.mrb[0].mxu0
        %v1047 = vadd.f32 %v821, %v1046
        %v1048 = vpop.f32.mrb[0].mxu0
        %v1049 = vadd.f32 %v825, %v1048
        %1050 = vmatprep.mubr.bf16.mxu0 %v783
        %1051 = vmatmul.mubr.bf16.gmra.mrb[0].mxu0 %v782
        %v1052 = vpop.f32.mrb[0].mxu0
        %v1053 = vadd.f32 %v821, %v1052
        %v1054 = vpop.f32.mrb[0].mxu0
        %v1055 = vadd.f32 %v825, %v1054
        %v1056 = vpop.f32.mrb[0].mxu0
        %v1057 = vadd.f32 %v821, %v1056
        %v1058 = vpop.f32.mrb[0].mxu0
        %v1059 = vadd.f32 %v825, %v1058
        %1060 = vdwg.mxu0
        %v1061 = vpack.c.bf16 %v1027, %v1023
        %v1062 = vpack.c.bf16 %v1029, %v1025
        %v1063 = vpack.c.bf16 %v1037, %v1033
        %v1064 = vpack.c.bf16 %v1039, %v1035
        %v1065 = vpack.c.bf16 %v1047, %v1043
        %v1066 = vpack.c.bf16 %v1049, %v1045
        %v1067 = vpack.c.bf16 %v1057, %v1053
        %v1068 = vpack.c.bf16 %v1059, %v1055
        %v1069 = vmax.bf16 %v1061, 0
        %v1070 = vmax.bf16 %v1062, 0
        %v1071 = vmax.bf16 %v1063, 0
        %v1072 = vmax.bf16 %v1064, 0
        %v1073 = vmax.bf16 %v1065, 0
        %v1074 = vmax.bf16 %v1066, 0
        %v1075 = vmax.bf16 %v1067, 0
        %v1076 = vmax.bf16 %v1068, 0
        %v1077 = vld [vmem:[%s7] sm:$0xf]
        %v1078 = vld [vmem:[%s7 + $0x4] sm:$0xf]
        %v1079 = vld [vmem:[%s7 + $0x8] sm:$0xf]
        %v1080 = vld [vmem:[%s7 + $0xc] sm:$0xf]
        %v1081 = vld [vmem:[%s7 + $0x10] sm:$0xf]
        %v1082 = vld [vmem:[%s7 + $0x14] sm:$0xf]
        %v1083 = vld [vmem:[%s7 + $0x18] sm:$0xf]
        %v1084 = vld [vmem:[%s7 + $0x1c] sm:$0xf]
        %v1085 = vld [vmem:[%s7 + $0x20] sm:$0xf]
        %v1086 = vld [vmem:[%s7 + $0x24] sm:$0xf]
        %v1087 = vld [vmem:[%s7 + $0x28] sm:$0xf]
        %v1088 = vld [vmem:[%s7 + $0x2c] sm:$0xf]
        %v1089 = vld [vmem:[%s7 + $0x30] sm:$0xf]
        %v1090 = vld [vmem:[%s7 + $0x34] sm:$0xf]
        %v1091 = vld [vmem:[%s7 + $0x38] sm:$0xf]
        %v1092 = vld [vmem:[%s7 + $0x3c] sm:$0xf]
        %v1093 = vld [vmem:[%s7 + $0x40] sm:$0xf]
        %v1094 = vld [vmem:[%s7 + $0x44] sm:$0xf]
        %v1095 = vld [vmem:[%s7 + $0x48] sm:$0xf]
        %v1096 = vld [vmem:[%s7 + $0x4c] sm:$0xf]
        %v1097 = vld [vmem:[%s7 + $0x50] sm:$0xf]
        %v1098 = vld [vmem:[%s7 + $0x54] sm:$0xf]
        %v1099 = vld [vmem:[%s7 + $0x58] sm:$0xf]
        %v1100 = vld [vmem:[%s7 + $0x5c] sm:$0xf]
        %v1101 = vld [vmem:[%s7 + $0x60] sm:$0xf]
        %v1102 = vld [vmem:[%s7 + $0x64] sm:$0xf]
        %v1103 = vld [vmem:[%s7 + $0x68] sm:$0xf]
        %v1104 = vld [vmem:[%s7 + $0x6c] sm:$0xf]
        %v1105 = vld [vmem:[%s7 + $0x70] sm:$0xf]
        %v1106 = vld [vmem:[%s7 + $0x74] sm:$0xf]
        %v1107 = vld [vmem:[%s7 + $0x78] sm:$0xf]
        %v1108 = vld [vmem:[%s7 + $0x7c] sm:$0xf]
        %v1109 = vld [vmem:[%s8] sm:$0x1]
        %v1111 = vlaneseq
        %v1112 = vshrl.u32 %v1111, 7
        %v1113 = vsub.s32 0, %v1112
        %v1114 = vrot.slane %v1109, %v1113
        %v1148 = vunpack.c.l.b16 %v1077
        %v1149 = vunpack.c.l.b16 %v1078
        %v1150 = vunpack.c.l.b16 %v1079
        %v1151 = vunpack.c.l.b16 %v1080
        %v1152 = vunpack.c.l.b16 %v1081
        %v1153 = vunpack.c.l.b16 %v1082
        %v1154 = vunpack.c.l.b16 %v1083
        %v1155 = vunpack.c.l.b16 %v1084
        %v1156 = vunpack.c.l.b16 %v1085
        %v1157 = vunpack.c.l.b16 %v1086
        %v1158 = vunpack.c.l.b16 %v1087
        %v1159 = vunpack.c.l.b16 %v1088
        %v1160 = vunpack.c.l.b16 %v1089
        %v1161 = vunpack.c.l.b16 %v1090
        %v1162 = vunpack.c.l.b16 %v1091
        %v1163 = vunpack.c.l.b16 %v1092
        %v1164 = vunpack.c.l.b16 %v1093
        %v1165 = vunpack.c.l.b16 %v1094
        %v1166 = vunpack.c.l.b16 %v1095
        %v1167 = vunpack.c.l.b16 %v1096
        %v1168 = vunpack.c.l.b16 %v1097
        %v1169 = vunpack.c.l.b16 %v1098
        %v1170 = vunpack.c.l.b16 %v1099
        %v1171 = vunpack.c.l.b16 %v1100
        %v1172 = vunpack.c.l.b16 %v1101
        %v1173 = vunpack.c.l.b16 %v1102
        %v1174 = vunpack.c.l.b16 %v1103
        %v1175 = vunpack.c.l.b16 %v1104
        %v1176 = vunpack.c.l.b16 %v1105
        %v1177 = vunpack.c.l.b16 %v1106
        %v1178 = vunpack.c.l.b16 %v1107
        %v1179 = vunpack.c.l.b16 %v1108
        %v1180 = vpack.c.b16 %v1149, %v1148
        %v1181 = vpack.c.b16 %v1151, %v1150
        %v1182 = vpack.c.b16 %v1153, %v1152
        %v1183 = vpack.c.b16 %v1155, %v1154
        %v1184 = vpack.c.b16 %v1157, %v1156
        %v1185 = vpack.c.b16 %v1159, %v1158
        %v1186 = vpack.c.b16 %v1161, %v1160
        %v1187 = vpack.c.b16 %v1163, %v1162
        %v1188 = vpack.c.b16 %v1165, %v1164
        %v1189 = vpack.c.b16 %v1167, %v1166
        %v1190 = vpack.c.b16 %v1169, %v1168
        %v1191 = vpack.c.b16 %v1171, %v1170
        %v1192 = vpack.c.b16 %v1173, %v1172
        %v1193 = vpack.c.b16 %v1175, %v1174
        %v1194 = vpack.c.b16 %v1177, %v1176
        %v1195 = vpack.c.b16 %v1179, %v1178
        %1212 = vmatprep.subr.bf16.mxu0 0
        %1213 = vmatpush1.bf16.msra.mxu0 %v1180
        %1214 = vmatprep.subr.bf16.mxu0 0
        %1215 = vmatpush1.bf16.msra.mxu0 %v1181
        %1216 = vmatprep.subr.bf16.mxu0 0
        %1217 = vmatpush1.bf16.msra.mxu0 %v1182
        %1218 = vmatprep.subr.bf16.mxu0 0
        %1219 = vmatpush1.bf16.msra.mxu0 %v1183
        %1220 = vmatprep.subr.bf16.mxu0 0
        %1221 = vmatpush1.bf16.msra.mxu0 %v1184
        %1222 = vmatprep.subr.bf16.mxu0 0
        %1223 = vmatpush1.bf16.msra.mxu0 %v1185
        %1224 = vmatprep.subr.bf16.mxu0 0
        %1225 = vmatpush1.bf16.msra.mxu0 %v1186
        %1226 = vmatprep.subr.bf16.mxu0 0
        %1227 = vmatpush1.bf16.msra.mxu0 %v1187
        %1228 = vmatprep.subr.bf16.mxu0 0
        %1229 = vmatpush1.bf16.msra.mxu0 %v1188
        %1230 = vmatprep.subr.bf16.mxu0 0
        %1231 = vmatpush1.bf16.msra.mxu0 %v1189
        %1232 = vmatprep.subr.bf16.mxu0 0
        %1233 = vmatpush1.bf16.msra.mxu0 %v1190
        %1234 = vmatprep.subr.bf16.mxu0 0
        %1235 = vmatpush1.bf16.msra.mxu0 %v1191
        %1236 = vmatprep.subr.bf16.mxu0 0
        %1237 = vmatpush1.bf16.msra.mxu0 %v1192
        %1238 = vmatprep.subr.bf16.mxu0 0
        %1239 = vmatpush1.bf16.msra.mxu0 %v1193
        %1240 = vmatprep.subr.bf16.mxu0 0
        %1241 = vmatpush1.bf16.msra.mxu0 %v1194
        %1242 = vmatprep.subr.bf16.mxu0 0
        %1243 = vmatpush1.bf16.msra.mxu0 %v1195
        %1244 = vmatprep.mubr.bf16.mxu0 %v1070
        %1245 = vmatmul.mubr.bf16.gmra.mrb[0].mxu0 %v1069
        %v1246 = vpop.f32.mrb[0].mxu0
        %v1247 = vadd.f32 %v1114, %v1246
        %v1248 = vpop.f32.mrb[0].mxu0
        %v1249 = vpop.f32.mrb[0].mxu0
        %v1250 = vadd.f32 %v1114, %v1249
        %v1251 = vpop.f32.mrb[0].mxu0
        %1252 = vmatprep.mubr.bf16.mxu0 %v1072
        %1253 = vmatmul.mubr.bf16.gmra.mrb[0].mxu0 %v1071
        %v1254 = vpop.f32.mrb[0].mxu0
        %v1255 = vadd.f32 %v1114, %v1254
        %v1256 = vpop.f32.mrb[0].mxu0
        %v1257 = vpop.f32.mrb[0].mxu0
        %v1258 = vadd.f32 %v1114, %v1257
        %v1259 = vpop.f32.mrb[0].mxu0
        %1260 = vmatprep.mubr.bf16.mxu0 %v1074
        %1261 = vmatmul.mubr.bf16.gmra.mrb[0].mxu0 %v1073
        %v1262 = vpop.f32.mrb[0].mxu0
        %v1263 = vadd.f32 %v1114, %v1262
        %v1264 = vpop.f32.mrb[0].mxu0
        %v1265 = vpop.f32.mrb[0].mxu0
        %v1266 = vadd.f32 %v1114, %v1265
        %v1267 = vpop.f32.mrb[0].mxu0
        %1268 = vmatprep.mubr.bf16.mxu0 %v1076
        %1269 = vmatmul.mubr.bf16.gmra.mrb[0].mxu0 %v1075
        %v1270 = vpop.f32.mrb[0].mxu0
        %v1271 = vadd.f32 %v1114, %v1270
        %v1272 = vpop.f32.mrb[0].mxu0
        %v1273 = vpop.f32.mrb[0].mxu0
        %v1274 = vadd.f32 %v1114, %v1273
        %v1275 = vpop.f32.mrb[0].mxu0
        %1276 = vdwg.mxu0
        %vm1277 = vcmask 64512
        %1278 = vst.msk [vmem:[%s349] sm:$0xff] %vm1277, %v1247
        %1279 = vst.msk [vmem:[%s349 + $0x8] sm:$0xff] %vm1277, %v1250
        %1280 = vst.msk [vmem:[%s349 + $0x10] sm:$0xff] %vm1277, %v1255
        %1281 = vst.msk [vmem:[%s349 + $0x18] sm:$0xff] %vm1277, %v1258
        %1282 = vst.msk [vmem:[%s349 + $0x20] sm:$0xff] %vm1277, %v1263
        %1283 = vst.msk [vmem:[%s349 + $0x28] sm:$0xff] %vm1277, %v1266
        %1284 = vst.msk [vmem:[%s349 + $0x30] sm:$0xff] %vm1277, %v1271
        %1285 = vst.msk [vmem:[%s349 + $0x38] sm:$0xff] %vm1277, %v1274
        %s1286 = smul.u32 8, %s21
        %p1287 = scmp.lt.s32.totalorder %s1286, 15
        %s1288 = scalar_select %p1287, %s1286, 15
        %s1289 = smul.addr %s1288, 8
        %s1290 = scalar_lea.vmem %s9, %s1289
        // Predicated region
        $region61: #{new_net_forward.1} parent=55 // pred_check
          %p1291 = pneg %p233
        $region62: #{new_net_forward.1} parent=55 // pred_check_branch
          %1293 = sbr.rel (%p1291) target = $region64
        $region63: #{new_net_forward.1} parent=55 // pred_region
          %s1294 = smul.u32 8, %s21
        $region64: #{new_net_forward.1} parent=55 // pred_fallthru
          _
      $region56: #{new_net_forward.1} parent=5 // pred_fallthru
        _
      %p1295 = scmp.le.s32.totalorder 2, %s16
      // Predicated region
      $region65: #{new_net_forward.1} parent=5 // pred_check
        %p1296 = pneg %p1295
      $region66: #{new_net_forward.1} parent=5 // pred_check_branch
        %1298 = sbr.rel (%p1296) target = $region68
      $region67: #{new_net_forward.1} parent=5 // pred_region
        %s1299 = ssub.s32 %s16, 2
        // Predicated region
        $region69: #{new_net_forward.1} parent=67 // pred_check
          %p1300 = pneg %p239
        $region70: #{new_net_forward.1} parent=67 // pred_check_branch
          %1302 = sbr.rel (%p1300) target = $region72
        $region71: #{new_net_forward.1} parent=67 // pred_region
          %s1303 = smul.u32 8, %s22
          %p1304 = scmp.lt.s32.totalorder %s1303, 15
          %s1305 = scalar_select %p1304, %s1303, 15
          %s1306 = smul.addr %s1305, 8
          %s1307 = scalar_lea.vmem %s9, %s1306
        $region72: #{new_net_forward.1} parent=67 // pred_fallthru
          _
      $region68: #{new_net_forward.1} parent=5 // pred_fallthru
        _
    $region6: #{new_net_forward.1} parent=1 // loop_footer
      %s20 = sadd.s32 1, %s16
    $region7: #{new_net_forward.1} parent=1 // loop_footer_branch
      %15 = sbr.rel target = $region3
    $region8: #{new_net_forward.1} parent=1 // loop_exit
      _
    %1308 = vsyncpa [#allocation3], 1
    %s1309 = scalar_lea.sflag [#allocation3], 1
    %1310 = vsyncpa %s1309, 1

</llo_original>
